<compile_context>
chip_gen: v7x
topology: tpu7x:2x2x1
jax: 0.10.0
libtpu: 0.0.40
codegen_flags: <defaults>
</compile_context>

<pallas_src>
import numpy as np
import jax
import jax.numpy as jnp
from jax.experimental import pallas as pl
from jax.experimental.pallas import tpu as pltpu

C1 = 0.01 ** 2
C2 = 0.03 ** 2


def _gaussian_1d(window_size, sigma=1.5):
    x = np.arange(window_size, dtype=np.float64)
    g = np.exp(-((x - window_size // 2) ** 2) / (2.0 * sigma ** 2))
    return (g / g.sum()).astype(np.float32)


def _band_matrix(n, g1d, pad):
    """K[i, j] = g1d[j - i + pad] (zero outside the window), so that the
    zero-padded 1-D conv along that axis equals K @ x."""
    ws = g1d.shape[0]
    K = np.zeros((n, n), dtype=np.float32)
    for i in range(n):
        for j in range(max(0, i - pad), min(n, i + pad + 1)):
            K[i, j] = g1d[j - i + pad]
    return K


def _masked_lane_weights(g1d, pad, W, n_chunks):
    """wt[k, j] = g1d[k] if tap k for lane j stays inside its own W-wide chunk
    (i.e. the zero-padding mask), else 0.  Lanes cover n_chunks chunks."""
    ws = g1d.shape[0]
    L = n_chunks * W
    w_in = np.arange(L) % W
    wt = np.zeros((ws, L), dtype=np.float32)
    for k in range(ws):
        o = k - pad
        valid = (w_in + o >= 0) & (w_in + o < W)
        wt[k] = np.where(valid, g1d[k], 0.0)
    return wt


def _pick_nt(N, H, W):
    """Largest slices-per-step that keeps live VMEM modest and keeps the
    input block either full-width or a multiple of 128 lanes."""
    budget = 8 * 1024 * 1024          # ~bytes of live f32 per grid step
    per_slice = 180 * H * W           # rough upper bound incl. double buffers
    cap = max(1, budget // per_slice)
    for nt in range(min(N, cap), 0, -1):
        if N % nt == 0 and (nt == N or (nt * W) % 128 == 0):
            return nt
    return N


def ssim_loss_pallas(img1, img2, window_size=11):
    B, C, H, W = img1.shape
    N = B * C
    ws = window_size
    pad = ws // 2
    g1d = _gaussian_1d(ws)

    Nt = _pick_nt(N, H, W)
    n_blocks = N // Nt
    G = Nt * W                   # lanes per fused map group in a block
    Lb = 5 * G                   # lanes of the fused 5-map slab

    kh = jnp.asarray(_band_matrix(H, g1d, pad))                   # (H, H)
    wt = jnp.asarray(_masked_lane_weights(g1d, pad, W, 5 * Nt))   # (ws, Lb)

    def to_slab(img):
        # (B, C, H, W) -> (H, N*W) lane-dense slab (wrapper-side layout plumbing)
        x = img.astype(jnp.float32).reshape(N, H, W)
        return jnp.transpose(x, (1, 0, 2)).reshape(H, N * W)

    x1s = to_slab(img1)
    x2s = to_slab(img2)

    def shift_cols(v, o):
        # v[:, j] -> v[:, (j + o) mod Lb]; out-of-chunk lanes are zeroed by `wt`.
        if o == 0:
            return v
        oo = o % Lb
        return jnp.concatenate([v[:, oo:], v[:, :oo]], axis=1)

    def kernel(x1_ref, x2_ref, kh_ref, wt_ref, out_ref):
        x1 = x1_ref[...]                                    # (H, G)
        x2 = x2_ref[...]                                    # (H, G)
        # Fuse all five filtered-map inputs along lanes -> (H, 5*G).
        maps = jnp.concatenate([x1, x2, x1 * x1, x2 * x2, x1 * x2], axis=1)
        # H-direction Gaussian conv (zero padded) == ONE band-matrix MXU matmul.
        t = jnp.dot(kh_ref[...], maps, preferred_element_type=jnp.float32)
        # W-direction Gaussian conv: 11 shift-and-FMA passes on the VPU with
        # per-lane masked weights (mask == zero padding at W-chunk edges).
        wts = wt_ref[...]                                   # (ws, 5*G)
        acc = wts[0:1, :] * shift_cols(t, 0 - pad)
        for k in range(1, ws):
            acc = acc + wts[k:k + 1, :] * shift_cols(t, k - pad)
        # SSIM map on the lane-dense map groups.
        mu1, mu2 = acc[:, 0:G], acc[:, G:2 * G]
        e11 = acc[:, 2 * G:3 * G]
        e22 = acc[:, 3 * G:4 * G]
        e12 = acc[:, 4 * G:5 * G]
        mu1_sq = mu1 * mu1
        mu2_sq = mu2 * mu2
        mu12 = mu1 * mu2
        s1 = e11 - mu1_sq
        s2 = e22 - mu2_sq
        s12 = e12 - mu12
        ssim = ((2.0 * mu12 + C1) * (2.0 * s12 + C2)) / (
            (mu1_sq + mu2_sq + C1) * (s1 + s2 + C2))
        # Per-block partial sum: no cross-step accumulator, so the grid axis is
        # fully parallel (v7x megacore); final mean is done in the wrapper.
        out_ref[...] = jnp.zeros(out_ref.shape, out_ref.dtype) + jnp.sum(ssim)

    partials = pl.pallas_call(
        kernel,
        out_shape=jax.ShapeDtypeStruct((n_blocks, 8, 128), jnp.float32),
        grid_spec=pltpu.PrefetchScalarGridSpec(
            num_scalar_prefetch=0,
            grid=(n_blocks,),
            in_specs=[
                pl.BlockSpec((H, G), lambda n: (0, n)),
                pl.BlockSpec((H, G), lambda n: (0, n)),
                # Grid-invariant constants (index_map always (0, 0)); Pallas
                # does not re-fetch them between steps.
                # TODO(synk): pipeline_mode=pl.Buffered(1) would also halve
                # their VMEM footprint; kept at default buffering for
                # portability across jax versions.
                pl.BlockSpec((H, H), lambda n: (0, 0)),
                pl.BlockSpec((ws, Lb), lambda n: (0, 0)),
            ],
            out_specs=pl.BlockSpec((1, 8, 128), lambda n: (n, 0, 0)),
        ),
        compiler_params=pltpu.CompilerParams(
            dimension_semantics=("parallel",),
            vmem_limit_bytes=32 * 1024 * 1024),
    )(x1s, x2s, kh, wt)

    total = float(B * C * H * W)
    return 1.0 - jnp.sum(partials[:, 0, 0]) / total


def ssim_loss_ref(img1, img2, window_size=11):
    """Pure-JAX reference mirroring the PyTorch module (grouped conv2d)."""
    B, C, H, W = img1.shape
    pad = window_size // 2
    g1d = _gaussian_1d(window_size)
    w2d = np.outer(g1d, g1d).astype(np.float32)
    window = jnp.asarray(
        np.broadcast_to(w2d, (C, 1, window_size, window_size)).copy())

    def conv(x):
        return jax.lax.conv_general_dilated(
            x, window, window_strides=(1, 1),
            padding=[(pad, pad), (pad, pad)],
            dimension_numbers=("NCHW", "OIHW", "NCHW"),
            feature_group_count=C)

    mu1 = conv(img1)
    mu2 = conv(img2)
    mu1_sq, mu2_sq, mu1_mu2 = mu1 ** 2, mu2 ** 2, mu1 * mu2
    sigma1_sq = conv(img1 ** 2) - mu1_sq
    sigma2_sq = conv(img2 ** 2) - mu2_sq
    sigma12 = conv(img1 * img2) - mu1_mu2
    ssim_map = ((2 * mu1_mu2 + C1) * (2 * sigma12 + C2)) / (
        (mu1_sq + mu2_sq + C1) * (sigma1_sq + sigma2_sq + C2))
    return 1.0 - jnp.mean(ssim_map)


if __name__ == "__main__":
    key = jax.random.PRNGKey(0)
    k1, k2 = jax.random.split(key)
    B, C, H, W = 2, 4, 16, 16
    img1 = jax.random.uniform(k1, (B, C, H, W), dtype=jnp.float32)
    img2 = jax.random.uniform(k2, (B, C, H, W), dtype=jnp.float32)

    loss = jax.block_until_ready(ssim_loss_pallas(img1, img2))
    ref = jax.block_until_ready(ssim_loss_ref(img1, img2))
    np.testing.assert_allclose(np.asarray(loss), np.asarray(ref),
                               rtol=1e-5, atol=2e-5)
    print("KERNEL_OK")
</pallas_src>

<mosaic_0001>
module attributes {stable_mosaic.version = 11 : i64} {
  func.func @kernel(%arg0: i32, %arg1: memref<16x128xf32, #tpu.memory_space<vmem>>, %arg2: memref<16x128xf32, #tpu.memory_space<vmem>>, %arg3: memref<16x16xf32, #tpu.memory_space<vmem>>, %arg4: memref<11x640xf32, #tpu.memory_space<vmem>>, %arg5: memref<1x8x128xf32, #tpu.memory_space<vmem>>) attributes {dimension_semantics = [#tpu.dimension_semantics<parallel>], iteration_bounds = array<i64: 1>, scalar_prefetch = 0 : i64, scratch_operands = 0 : i64, tpu.core_type = #tpu.core_type<tc>, window_params = [{transform_indices = @transform_0, window_bounds = array<i64: 16, 128>}, {transform_indices = @transform_1, window_bounds = array<i64: 16, 128>}, {pipeline_mode = #tpu.pipeline_mode<synchronous>, transform_indices = @transform_2, window_bounds = array<i64: 16, 16>}, {pipeline_mode = #tpu.pipeline_mode<synchronous>, transform_indices = @transform_3, window_bounds = array<i64: 11, 640>}, {transform_indices = @transform_4, window_bounds = array<i64: 1, 8, 128>}]} {
    %c0 = arith.constant 0 : index
    %c0_0 = arith.constant 0 : index
    %0 = vector.load %arg1[%c0, %c0_0] : memref<16x128xf32, #tpu.memory_space<vmem>>, vector<16x128xf32>
    %c0_1 = arith.constant 0 : index
    %c0_2 = arith.constant 0 : index
    %1 = vector.load %arg2[%c0_1, %c0_2] : memref<16x128xf32, #tpu.memory_space<vmem>>, vector<16x128xf32>
    %2 = arith.mulf %0, %0 : vector<16x128xf32>
    %3 = arith.mulf %1, %1 : vector<16x128xf32>
    %4 = arith.mulf %0, %1 : vector<16x128xf32>
    %5 = tpu.concatenate %0, %1, %2, %3, %4 in 1 : vector<16x128xf32>, vector<16x128xf32>, vector<16x128xf32>, vector<16x128xf32>, vector<16x128xf32> -> vector<16x640xf32>
    %c0_3 = arith.constant 0 : index
    %c0_4 = arith.constant 0 : index
    %6 = vector.load %arg3[%c0_3, %c0_4] : memref<16x16xf32, #tpu.memory_space<vmem>>, vector<16x16xf32>
    %cst = arith.constant dense<0.000000e+00> : vector<16x640xf32>
    %7 = tpu.matmul %6, %5, %cst {dimension_numbers = #tpu.dot_dimension_numbers<[1], [0], [0], [1], [0, 0, 1, 1], [], []>} : vector<16x16xf32>, vector<16x640xf32>, vector<16x640xf32> -> vector<16x640xf32>
    %c0_5 = arith.constant 0 : index
    %c0_6 = arith.constant 0 : index
    %8 = vector.load %arg4[%c0_5, %c0_6] : memref<11x640xf32, #tpu.memory_space<vmem>>, vector<11x640xf32>
    %9 = vector.extract_strided_slice %8 {offsets = [0, 0], sizes = [1, 640], strides = [1, 1]} : vector<11x640xf32> to vector<1x640xf32>
    %10 = vector.extract_strided_slice %7 {offsets = [0, 635], sizes = [16, 5], strides = [1, 1]} : vector<16x640xf32> to vector<16x5xf32>
    %11 = vector.extract_strided_slice %7 {offsets = [0, 0], sizes = [16, 635], strides = [1, 1]} : vector<16x640xf32> to vector<16x635xf32>
    %12 = tpu.concatenate %10, %11 in 1 : vector<16x5xf32>, vector<16x635xf32> -> vector<16x640xf32>
    %13 = vector.broadcast %9 : vector<1x640xf32> to vector<16x640xf32>
    %14 = arith.mulf %13, %12 : vector<16x640xf32>
    %15 = vector.extract_strided_slice %8 {offsets = [1, 0], sizes = [1, 640], strides = [1, 1]} : vector<11x640xf32> to vector<1x640xf32>
    %16 = vector.extract_strided_slice %7 {offsets = [0, 636], sizes = [16, 4], strides = [1, 1]} : vector<16x640xf32> to vector<16x4xf32>
    %17 = vector.extract_strided_slice %7 {offsets = [0, 0], sizes = [16, 636], strides = [1, 1]} : vector<16x640xf32> to vector<16x636xf32>
    %18 = tpu.concatenate %16, %17 in 1 : vector<16x4xf32>, vector<16x636xf32> -> vector<16x640xf32>
    %19 = vector.broadcast %15 : vector<1x640xf32> to vector<16x640xf32>
    %20 = arith.mulf %19, %18 : vector<16x640xf32>
    %21 = arith.addf %14, %20 : vector<16x640xf32>
    %22 = vector.extract_strided_slice %8 {offsets = [2, 0], sizes = [1, 640], strides = [1, 1]} : vector<11x640xf32> to vector<1x640xf32>
    %23 = vector.extract_strided_slice %7 {offsets = [0, 637], sizes = [16, 3], strides = [1, 1]} : vector<16x640xf32> to vector<16x3xf32>
    %24 = vector.extract_strided_slice %7 {offsets = [0, 0], sizes = [16, 637], strides = [1, 1]} : vector<16x640xf32> to vector<16x637xf32>
    %25 = tpu.concatenate %23, %24 in 1 : vector<16x3xf32>, vector<16x637xf32> -> vector<16x640xf32>
    %26 = vector.broadcast %22 : vector<1x640xf32> to vector<16x640xf32>
    %27 = arith.mulf %26, %25 : vector<16x640xf32>
    %28 = arith.addf %21, %27 : vector<16x640xf32>
    %29 = vector.extract_strided_slice %8 {offsets = [3, 0], sizes = [1, 640], strides = [1, 1]} : vector<11x640xf32> to vector<1x640xf32>
    %30 = vector.extract_strided_slice %7 {offsets = [0, 638], sizes = [16, 2], strides = [1, 1]} : vector<16x640xf32> to vector<16x2xf32>
    %31 = vector.extract_strided_slice %7 {offsets = [0, 0], sizes = [16, 638], strides = [1, 1]} : vector<16x640xf32> to vector<16x638xf32>
    %32 = tpu.concatenate %30, %31 in 1 : vector<16x2xf32>, vector<16x638xf32> -> vector<16x640xf32>
    %33 = vector.broadcast %29 : vector<1x640xf32> to vector<16x640xf32>
    %34 = arith.mulf %33, %32 : vector<16x640xf32>
    %35 = arith.addf %28, %34 : vector<16x640xf32>
    %36 = vector.extract_strided_slice %8 {offsets = [4, 0], sizes = [1, 640], strides = [1, 1]} : vector<11x640xf32> to vector<1x640xf32>
    %37 = vector.extract_strided_slice %7 {offsets = [0, 639], sizes = [16, 1], strides = [1, 1]} : vector<16x640xf32> to vector<16x1xf32>
    %38 = vector.extract_strided_slice %7 {offsets = [0, 0], sizes = [16, 639], strides = [1, 1]} : vector<16x640xf32> to vector<16x639xf32>
    %39 = tpu.concatenate %37, %38 in 1 : vector<16x1xf32>, vector<16x639xf32> -> vector<16x640xf32>
    %40 = vector.broadcast %36 : vector<1x640xf32> to vector<16x640xf32>
    %41 = arith.mulf %40, %39 : vector<16x640xf32>
    %42 = arith.addf %35, %41 : vector<16x640xf32>
    %43 = vector.extract_strided_slice %8 {offsets = [5, 0], sizes = [1, 640], strides = [1, 1]} : vector<11x640xf32> to vector<1x640xf32>
    %44 = vector.broadcast %43 : vector<1x640xf32> to vector<16x640xf32>
    %45 = arith.mulf %44, %7 : vector<16x640xf32>
    %46 = arith.addf %42, %45 : vector<16x640xf32>
    %47 = vector.extract_strided_slice %8 {offsets = [6, 0], sizes = [1, 640], strides = [1, 1]} : vector<11x640xf32> to vector<1x640xf32>
    %48 = vector.extract_strided_slice %7 {offsets = [0, 1], sizes = [16, 639], strides = [1, 1]} : vector<16x640xf32> to vector<16x639xf32>
    %49 = vector.extract_strided_slice %7 {offsets = [0, 0], sizes = [16, 1], strides = [1, 1]} : vector<16x640xf32> to vector<16x1xf32>
    %50 = tpu.concatenate %48, %49 in 1 : vector<16x639xf32>, vector<16x1xf32> -> vector<16x640xf32>
    %51 = vector.broadcast %47 : vector<1x640xf32> to vector<16x640xf32>
    %52 = arith.mulf %51, %50 : vector<16x640xf32>
    %53 = arith.addf %46, %52 : vector<16x640xf32>
    %54 = vector.extract_strided_slice %8 {offsets = [7, 0], sizes = [1, 640], strides = [1, 1]} : vector<11x640xf32> to vector<1x640xf32>
    %55 = vector.extract_strided_slice %7 {offsets = [0, 2], sizes = [16, 638], strides = [1, 1]} : vector<16x640xf32> to vector<16x638xf32>
    %56 = vector.extract_strided_slice %7 {offsets = [0, 0], sizes = [16, 2], strides = [1, 1]} : vector<16x640xf32> to vector<16x2xf32>
    %57 = tpu.concatenate %55, %56 in 1 : vector<16x638xf32>, vector<16x2xf32> -> vector<16x640xf32>
    %58 = vector.broadcast %54 : vector<1x640xf32> to vector<16x640xf32>
    %59 = arith.mulf %58, %57 : vector<16x640xf32>
    %60 = arith.addf %53, %59 : vector<16x640xf32>
    %61 = vector.extract_strided_slice %8 {offsets = [8, 0], sizes = [1, 640], strides = [1, 1]} : vector<11x640xf32> to vector<1x640xf32>
    %62 = vector.extract_strided_slice %7 {offsets = [0, 3], sizes = [16, 637], strides = [1, 1]} : vector<16x640xf32> to vector<16x637xf32>
    %63 = vector.extract_strided_slice %7 {offsets = [0, 0], sizes = [16, 3], strides = [1, 1]} : vector<16x640xf32> to vector<16x3xf32>
    %64 = tpu.concatenate %62, %63 in 1 : vector<16x637xf32>, vector<16x3xf32> -> vector<16x640xf32>
    %65 = vector.broadcast %61 : vector<1x640xf32> to vector<16x640xf32>
    %66 = arith.mulf %65, %64 : vector<16x640xf32>
    %67 = arith.addf %60, %66 : vector<16x640xf32>
    %68 = vector.extract_strided_slice %8 {offsets = [9, 0], sizes = [1, 640], strides = [1, 1]} : vector<11x640xf32> to vector<1x640xf32>
    %69 = vector.extract_strided_slice %7 {offsets = [0, 4], sizes = [16, 636], strides = [1, 1]} : vector<16x640xf32> to vector<16x636xf32>
    %70 = vector.extract_strided_slice %7 {offsets = [0, 0], sizes = [16, 4], strides = [1, 1]} : vector<16x640xf32> to vector<16x4xf32>
    %71 = tpu.concatenate %69, %70 in 1 : vector<16x636xf32>, vector<16x4xf32> -> vector<16x640xf32>
    %72 = vector.broadcast %68 : vector<1x640xf32> to vector<16x640xf32>
    %73 = arith.mulf %72, %71 : vector<16x640xf32>
    %74 = arith.addf %67, %73 : vector<16x640xf32>
    %75 = vector.extract_strided_slice %8 {offsets = [10, 0], sizes = [1, 640], strides = [1, 1]} : vector<11x640xf32> to vector<1x640xf32>
    %76 = vector.extract_strided_slice %7 {offsets = [0, 5], sizes = [16, 635], strides = [1, 1]} : vector<16x640xf32> to vector<16x635xf32>
    %77 = vector.extract_strided_slice %7 {offsets = [0, 0], sizes = [16, 5], strides = [1, 1]} : vector<16x640xf32> to vector<16x5xf32>
    %78 = tpu.concatenate %76, %77 in 1 : vector<16x635xf32>, vector<16x5xf32> -> vector<16x640xf32>
    %79 = vector.broadcast %75 : vector<1x640xf32> to vector<16x640xf32>
    %80 = arith.mulf %79, %78 : vector<16x640xf32>
    %81 = arith.addf %74, %80 : vector<16x640xf32>
    %82 = vector.extract_strided_slice %81 {offsets = [0, 0], sizes = [16, 128], strides = [1, 1]} : vector<16x640xf32> to vector<16x128xf32>
    %83 = vector.extract_strided_slice %81 {offsets = [0, 128], sizes = [16, 128], strides = [1, 1]} : vector<16x640xf32> to vector<16x128xf32>
    %84 = vector.extract_strided_slice %81 {offsets = [0, 256], sizes = [16, 128], strides = [1, 1]} : vector<16x640xf32> to vector<16x128xf32>
    %85 = vector.extract_strided_slice %81 {offsets = [0, 384], sizes = [16, 128], strides = [1, 1]} : vector<16x640xf32> to vector<16x128xf32>
    %86 = vector.extract_strided_slice %81 {offsets = [0, 512], sizes = [16, 128], strides = [1, 1]} : vector<16x640xf32> to vector<16x128xf32>
    %87 = arith.mulf %82, %82 : vector<16x128xf32>
    %88 = arith.mulf %83, %83 : vector<16x128xf32>
    %89 = arith.mulf %82, %83 : vector<16x128xf32>
    %90 = arith.subf %84, %87 : vector<16x128xf32>
    %91 = arith.subf %85, %88 : vector<16x128xf32>
    %92 = arith.subf %86, %89 : vector<16x128xf32>
    %cst_7 = arith.constant 2.000000e+00 : f32
    %93 = vector.broadcast %cst_7 : f32 to vector<16x128xf32>
    %94 = arith.mulf %93, %89 : vector<16x128xf32>
    %cst_8 = arith.constant 9.99999974E-5 : f32
    %95 = vector.broadcast %cst_8 : f32 to vector<16x128xf32>
    %96 = arith.addf %94, %95 : vector<16x128xf32>
    %cst_9 = arith.constant 2.000000e+00 : f32
    %97 = vector.broadcast %cst_9 : f32 to vector<16x128xf32>
    %98 = arith.mulf %97, %92 : vector<16x128xf32>
    %cst_10 = arith.constant 8.99999984E-4 : f32
    %99 = vector.broadcast %cst_10 : f32 to vector<16x128xf32>
    %100 = arith.addf %98, %99 : vector<16x128xf32>
    %101 = arith.mulf %96, %100 : vector<16x128xf32>
    %102 = arith.addf %87, %88 : vector<16x128xf32>
    %cst_11 = arith.constant 9.99999974E-5 : f32
    %103 = vector.broadcast %cst_11 : f32 to vector<16x128xf32>
    %104 = arith.addf %102, %103 : vector<16x128xf32>
    %105 = arith.addf %90, %91 : vector<16x128xf32>
    %cst_12 = arith.constant 8.99999984E-4 : f32
    %106 = vector.broadcast %cst_12 : f32 to vector<16x128xf32>
    %107 = arith.addf %105, %106 : vector<16x128xf32>
    %108 = arith.mulf %104, %107 : vector<16x128xf32>
    %109 = arith.divf %101, %108 : vector<16x128xf32>
    %cst_13 = arith.constant 0.000000e+00 : f32
    %110 = vector.broadcast %cst_13 : f32 to vector<1x8x128xf32>
    %111 = vector.shape_cast %109 : vector<16x128xf32> to vector<1x16x128xf32>
    %cst_14 = arith.constant dense<0.000000e+00> : vector<1xf32>
    %112 = vector.multi_reduction <add>, %111, %cst_14 [1, 2] : vector<1x16x128xf32> to vector<1xf32>
    %113 = vector.shape_cast %112 : vector<1xf32> to vector<1x1x1xf32>
    %114 = vector.extract %113[0, 0, 0] : f32 from vector<1x1x1xf32>
    %115 = vector.broadcast %114 : f32 to vector<1x8x128xf32>
    %116 = arith.addf %110, %115 : vector<1x8x128xf32>
    %c0_15 = arith.constant 0 : index
    %c0_16 = arith.constant 0 : index
    %c0_17 = arith.constant 0 : index
    %117 = vector.load %arg5[%c0_15, %c0_16, %c0_17] : memref<1x8x128xf32, #tpu.memory_space<vmem>>, vector<1x8x128xf32>
    tpu.vector_store %arg5[%c0_15, %c0_16, %c0_17], %116 {strides = array<i32>} : memref<1x8x128xf32, #tpu.memory_space<vmem>>, vector<1x8x128xf32>,
    return
  }
  func.func @transform_0(%arg0: i32) -> (i32, i32) {
    %c0_i32 = arith.constant 0 : i32
    %c0_i32_0 = arith.constant 0 : i32
    return %c0_i32, %arg0 : i32, i32
  }
  func.func @transform_1(%arg0: i32) -> (i32, i32) {
    %c0_i32 = arith.constant 0 : i32
    %c0_i32_0 = arith.constant 0 : i32
    return %c0_i32, %arg0 : i32, i32
  }
  func.func @transform_2(%arg0: i32) -> (i32, i32) {
    %c0_i32 = arith.constant 0 : i32
    %c0_i32_0 = arith.constant 0 : i32
    %c0_i32_1 = arith.constant 0 : i32
    return %c0_i32, %c0_i32_0 : i32, i32
  }
  func.func @transform_3(%arg0: i32) -> (i32, i32) {
    %c0_i32 = arith.constant 0 : i32
    %c0_i32_0 = arith.constant 0 : i32
    %c0_i32_1 = arith.constant 0 : i32
    return %c0_i32, %c0_i32_0 : i32, i32
  }
  func.func @transform_4(%arg0: i32) -> (i32, i32, i32) {
    %c0_i32 = arith.constant 0 : i32
    %c0_i32_0 = arith.constant 0 : i32
    %c0_i32_1 = arith.constant 0 : i32
    return %arg0, %c0_i32, %c0_i32_0 : i32, i32, i32
  }
}

</mosaic_0001>

<llo_original>
// kernel: tpu_custom_call.1
$region0: #{tpu_custom_call.1}
  #allocation0 [shape = 'u32[]', space=smem, size = 0x4, offset = 0x4, fixed_abs, tag = 'smem constant byte address 0x4 - core index']
  #allocation1 [shape = 'u32[144,128]{1,0:T(1,128)}', space=vmem, size = 0x12000, scoped, tag = 'internal scratch']
  %s0 = inlined_call_operand.hbm [shape: f32[16,128], index: 0, kind: input, shape index: {}]
  %s1 = inlined_call_operand.hbm [shape: f32[16,128], index: 1, kind: input, shape index: {}]
  %s2 = inlined_call_operand.hbm [shape: f32[16,16], index: 2, kind: input, shape index: {}]
  %s3 = inlined_call_operand.hbm [shape: f32[11,640], index: 3, kind: input, shape index: {}]
  %s4 = inlined_call_operand.hbm [shape: f32[1,8,128], index: 4, kind: output, shape index: {}]
  %s5 = sld [smem:[#allocation0]]
  $region42: #{tpu_custom_call.1} parent=0
    _
  %s7 = ssub.s32 1, %s5
  %s8 = scalar_select 0, %s7, %s5
  $region1: #{tpu_custom_call.1} parent=0
    #allocation2 [shape = 'u8[8192]{0}', space=vmem, size = 0x2000, scoped, tag = 'input window, operand 0, single buffered']
    #allocation3 [shape = 's32[1]{0}', space=sflag, size = 0x4, scoped, tag = 'scoped memory for tpu_custom_call.1']
    #allocation4 [shape = 's32[1]{0}', space=sflag, size = 0x4, scoped, tag = 'scoped memory for tpu_custom_call.1']
    #allocation5 [shape = 'u8[8192]{0}', space=vmem, size = 0x2000, scoped, tag = 'input window, operand 1, single buffered']
    #allocation6 [shape = 's32[1]{0}', space=sflag, size = 0x4, scoped, tag = 'scoped memory for tpu_custom_call.1']
    #allocation7 [shape = 'u8[8192]{0}', space=vmem, size = 0x2000, scoped, tag = 'input window, operand 2, single buffered']
    #allocation8 [shape = 'u8[40960]{0}', space=vmem, size = 0xa000, scoped, tag = 'input window, operand 3, single buffered']
    #allocation9 [shape = 's32[1]{0}', space=sflag, size = 0x4, scoped, tag = 'scoped memory for tpu_custom_call.1']
    #allocation10 [shape = 'u8[4096]{0}', space=vmem, size = 0x1000, scoped, tag = 'output window, operand 0, single buffered']
    %9 = vsyncpa [#allocation3], 0
    %10 = vsyncpa [#allocation6], 0
    %11 = vsyncpa [#allocation9], 0
    %12 = vsyncpa [#allocation4], 0
    // Predicated region
    $region2: #{tpu_custom_call.1} parent=1 // pred_check
      _
    $region3: #{tpu_custom_call.1} parent=1 // pred_check_branch
      %14 = sbr.rel (0) target = $region5
    $region4: #{tpu_custom_call.1} parent=1 // pred_region
      %s16 = ssub.s32 256, 256
      %17 = vsyncadd [#allocation3], %s16
      %s18 = sshll.u32 [#allocation2], 4
      %s19 = int_to_ptr.vmem [resolvable:$true] %s18
      %24 = dma.hbm_to_vmem [thread:$0]  %s0, 256, %s19, [#allocation3], 128, 128, 8
    $region5: #{tpu_custom_call.1} parent=1 // pred_fallthru
      _
    // Predicated region
    $region6: #{tpu_custom_call.1} parent=1 // pred_check
      _
    $region7: #{tpu_custom_call.1} parent=1 // pred_check_branch
      %26 = sbr.rel (0) target = $region9
    $region8: #{tpu_custom_call.1} parent=1 // pred_region
      %s28 = ssub.s32 256, 256
      %29 = vsyncadd [#allocation6], %s28
      %s30 = sshll.u32 [#allocation5], 4
      %s31 = int_to_ptr.vmem [resolvable:$true] %s30
      %36 = dma.hbm_to_vmem [thread:$0]  %s1, 256, %s31, [#allocation6], 128, 128, 8
    $region9: #{tpu_custom_call.1} parent=1 // pred_fallthru
      _
    // Predicated region
    $region10: #{tpu_custom_call.1} parent=1 // pred_check
      _
    $region11: #{tpu_custom_call.1} parent=1 // pred_check_branch
      %38 = sbr.rel (0) target = $region13
    $region12: #{tpu_custom_call.1} parent=1 // pred_region
      %s40 = ssub.s32 256, 256
      %41 = vsyncadd [#allocation6], %s40
      %s42 = sshll.u32 [#allocation7], 4
      %s43 = int_to_ptr.vmem [resolvable:$true] %s42
      %48 = dma.hbm_to_vmem [thread:$0]  %s2, 256, %s43, [#allocation6], 128, 128, 8
    $region13: #{tpu_custom_call.1} parent=1 // pred_fallthru
      _
    // Predicated region
    $region14: #{tpu_custom_call.1} parent=1 // pred_check
      _
    $region15: #{tpu_custom_call.1} parent=1 // pred_check_branch
      %50 = sbr.rel (0) target = $region17
    $region16: #{tpu_custom_call.1} parent=1 // pred_region
      %s52 = ssub.s32 1280, 1280
      %53 = vsyncadd [#allocation9], %s52
      %s54 = sshll.u32 [#allocation8], 4
      %s55 = int_to_ptr.vmem [resolvable:$true] %s54
      %60 = dma.hbm_to_vmem [thread:$0]  %s3, 1280, %s55, [#allocation9], 640, 640, 40
    $region17: #{tpu_custom_call.1} parent=1 // pred_fallthru
      _
    // Predicated region
    $region18: #{tpu_custom_call.1} parent=1 // pred_check
      _
    $region19: #{tpu_custom_call.1} parent=1 // pred_check_branch
      %62 = sbr.rel (0) target = $region21
    $region20: #{tpu_custom_call.1} parent=1 // pred_region
      %63 = dma.done [#allocation3], 256
    $region21: #{tpu_custom_call.1} parent=1 // pred_fallthru
      _
    // Predicated region
    $region22: #{tpu_custom_call.1} parent=1 // pred_check
      _
    $region23: #{tpu_custom_call.1} parent=1 // pred_check_branch
      %65 = sbr.rel (0) target = $region25
    $region24: #{tpu_custom_call.1} parent=1 // pred_region
      %66 = dma.done [#allocation6], 256
    $region25: #{tpu_custom_call.1} parent=1 // pred_fallthru
      _
    // Predicated region
    $region26: #{tpu_custom_call.1} parent=1 // pred_check
      _
    $region27: #{tpu_custom_call.1} parent=1 // pred_check_branch
      %68 = sbr.rel (0) target = $region29
    $region28: #{tpu_custom_call.1} parent=1 // pred_region
      %69 = dma.done [#allocation6], 256
    $region29: #{tpu_custom_call.1} parent=1 // pred_fallthru
      _
    // Predicated region
    $region30: #{tpu_custom_call.1} parent=1 // pred_check
      _
    $region31: #{tpu_custom_call.1} parent=1 // pred_check_branch
      %71 = sbr.rel (0) target = $region33
    $region32: #{tpu_custom_call.1} parent=1 // pred_region
      %72 = dma.done [#allocation9], 1280
    $region33: #{tpu_custom_call.1} parent=1 // pred_fallthru
      _
    %v73 = vld [vmem:[#allocation2] sm:$0xff]
    %v74 = vld [vmem:[#allocation2 + $0x8] sm:$0xff]
    %v75 = vld [vmem:[#allocation5] sm:$0xff]
    %v76 = vld [vmem:[#allocation5 + $0x8] sm:$0xff]
    %v77 = vmul.f32 %v73, %v73
    %v78 = vmul.f32 %v74, %v74
    %v79 = vmul.f32 %v75, %v75
    %v80 = vmul.f32 %v76, %v76
    %v81 = vmul.f32 %v73, %v75
    %v82 = vmul.f32 %v74, %v76
    %v83 = vld [vmem:[#allocation7] sm:$0xff]
    %v84 = vld [vmem:[#allocation7 + $0x8] sm:$0xff]
    %vm85 = vcmask 130048
    %v87 = vsel %vm85, %v83, 0
    %v90 = vsel %vm85, %v84, 0
    %92 = vmatprep.subr.mxu0 %v75
    %93 = vmatpush1.msra.mxu0 %v73
    %94 = vmatprep.subr.mxu0 %v76
    %95 = vmatpush1.msra.mxu0 %v74
    %96 = vmatprep.subr.mxu0 0.0
    %97 = vmatpush1.msra.mxu0 0.0
    %98 = vmatprep.subr.mxu0 0.0
    %99 = vmatpush1.msra.mxu0 0.0
    %100 = vmatprep.subr.mxu0 0.0
    %101 = vmatpush1.msra.mxu0 0.0
    %102 = vmatprep.subr.mxu0 0.0
    %103 = vmatpush1.msra.mxu0 0.0
    %104 = vmatprep.subr.mxu0 0.0
    %105 = vmatpush1.msra.mxu0 0.0
    %106 = vmatprep.subr.mxu0 0.0
    %107 = vmatpush1.msra.mxu0 0.0
    %108 = vmatprep.subr.mxu0 0.0
    %109 = vmatpush1.msra.mxu0 0.0
    %110 = vmatprep.subr.mxu0 0.0
    %111 = vmatpush1.msra.mxu0 0.0
    %112 = vmatprep.subr.mxu0 0.0
    %113 = vmatpush1.msra.mxu0 0.0
    %114 = vmatprep.subr.mxu0 0.0
    %115 = vmatpush1.msra.mxu0 0.0
    %116 = vmatprep.subr.mxu0 0.0
    %117 = vmatpush1.msra.mxu0 0.0
    %118 = vmatprep.subr.mxu0 0.0
    %119 = vmatpush1.msra.mxu0 0.0
    %120 = vmatprep.subr.mxu0 0.0
    %121 = vmatpush1.msra.mxu0 0.0
    %122 = vmatprep.subr.mxu0 0.0
    %123 = vmatpush1.msra.mxu0 0.0
    %124 = vmatprep.subr.mxu0 0.0
    %125 = vmatpush1.msra.mxu0 0.0
    %126 = vmatprep.subr.mxu0 0.0
    %127 = vmatpush1.msra.mxu0 0.0
    %128 = vmatprep.subr.mxu0 0.0
    %129 = vmatpush1.msra.mxu0 0.0
    %130 = vmatprep.subr.mxu0 0.0
    %131 = vmatpush1.msra.mxu0 0.0
    %132 = vmatprep.subr.mxu0 0.0
    %133 = vmatpush1.msra.mxu0 0.0
    %134 = vmatprep.subr.mxu0 0.0
    %135 = vmatpush1.msra.mxu0 0.0
    %136 = vmatprep.subr.mxu0 0.0
    %137 = vmatpush1.msra.mxu0 0.0
    %138 = vmatprep.subr.mxu0 0.0
    %139 = vmatpush1.msra.mxu0 0.0
    %140 = vmatprep.subr.mxu0 0.0
    %141 = vmatpush1.msra.mxu0 0.0
    %142 = vmatprep.subr.mxu0 0.0
    %143 = vmatpush1.msra.mxu0 0.0
    %144 = vmatprep.subr.mxu0 0.0
    %145 = vmatpush1.msra.mxu0 0.0
    %146 = vmatprep.subr.mxu0 0.0
    %147 = vmatpush1.msra.mxu0 0.0
    %148 = vmatprep.subr.mxu0 0.0
    %149 = vmatpush1.msra.mxu0 0.0
    %150 = vmatprep.subr.mxu0 0.0
    %151 = vmatpush1.msra.mxu0 0.0
    %152 = vmatprep.subr.mxu0 0.0
    %153 = vmatpush1.msra.mxu0 0.0
    %154 = vmatprep.subr.mxu0 0.0
    %155 = vmatpush1.msra.mxu0 0.0
    %156 = vmatprep.mubr.f32.mxu0 0.0
    %157 = vmatmul.mubr.f32.gmra.mrb[0].mxu0 %v87
    %v158 = vpop.f32.mrb[0].mxu0
    %v159 = vadd.f32 0.0, %v158
    %v160 = vpop.f32.mrb[0].mxu0
    %v161 = vadd.f32 0.0, %v160
    %162 = vmatprep.mubr.f32.mxu0 0.0
    %163 = vmatmul.mubr.f32.gmra.mrb[0].mxu0 %v90
    %v164 = vpop.f32.mrb[0].mxu0
    %v165 = vadd.f32 0.0, %v164
    %v166 = vpop.f32.mrb[0].mxu0
    %v167 = vadd.f32 0.0, %v166
    %168 = vdwg.mxu0
    %169 = vmatprep.subr.mxu0 %v79
    %170 = vmatpush1.msra.mxu0 %v77
    %171 = vmatprep.subr.mxu0 %v80
    %172 = vmatpush1.msra.mxu0 %v78
    %173 = vmatprep.subr.mxu0 0.0
    %174 = vmatpush1.msra.mxu0 0.0
    %175 = vmatprep.subr.mxu0 0.0
    %176 = vmatpush1.msra.mxu0 0.0
    %177 = vmatprep.subr.mxu0 0.0
    %178 = vmatpush1.msra.mxu0 0.0
    %179 = vmatprep.subr.mxu0 0.0
    %180 = vmatpush1.msra.mxu0 0.0
    %181 = vmatprep.subr.mxu0 0.0
    %182 = vmatpush1.msra.mxu0 0.0
    %183 = vmatprep.subr.mxu0 0.0
    %184 = vmatpush1.msra.mxu0 0.0
    %185 = vmatprep.subr.mxu0 0.0
    %186 = vmatpush1.msra.mxu0 0.0
    %187 = vmatprep.subr.mxu0 0.0
    %188 = vmatpush1.msra.mxu0 0.0
    %189 = vmatprep.subr.mxu0 0.0
    %190 = vmatpush1.msra.mxu0 0.0
    %191 = vmatprep.subr.mxu0 0.0
    %192 = vmatpush1.msra.mxu0 0.0
    %193 = vmatprep.subr.mxu0 0.0
    %194 = vmatpush1.msra.mxu0 0.0
    %195 = vmatprep.subr.mxu0 0.0
    %196 = vmatpush1.msra.mxu0 0.0
    %197 = vmatprep.subr.mxu0 0.0
    %198 = vmatpush1.msra.mxu0 0.0
    %199 = vmatprep.subr.mxu0 0.0
    %200 = vmatpush1.msra.mxu0 0.0
    %201 = vmatprep.subr.mxu0 0.0
    %202 = vmatpush1.msra.mxu0 0.0
    %203 = vmatprep.subr.mxu0 0.0
    %204 = vmatpush1.msra.mxu0 0.0
    %205 = vmatprep.subr.mxu0 0.0
    %206 = vmatpush1.msra.mxu0 0.0
    %207 = vmatprep.subr.mxu0 0.0
    %208 = vmatpush1.msra.mxu0 0.0
    %209 = vmatprep.subr.mxu0 0.0
    %210 = vmatpush1.msra.mxu0 0.0
    %211 = vmatprep.subr.mxu0 0.0
    %212 = vmatpush1.msra.mxu0 0.0
    %213 = vmatprep.subr.mxu0 0.0
    %214 = vmatpush1.msra.mxu0 0.0
    %215 = vmatprep.subr.mxu0 0.0
    %216 = vmatpush1.msra.mxu0 0.0
    %217 = vmatprep.subr.mxu0 0.0
    %218 = vmatpush1.msra.mxu0 0.0
    %219 = vmatprep.subr.mxu0 0.0
    %220 = vmatpush1.msra.mxu0 0.0
    %221 = vmatprep.subr.mxu0 0.0
    %222 = vmatpush1.msra.mxu0 0.0
    %223 = vmatprep.subr.mxu0 0.0
    %224 = vmatpush1.msra.mxu0 0.0
    %225 = vmatprep.subr.mxu0 0.0
    %226 = vmatpush1.msra.mxu0 0.0
    %227 = vmatprep.subr.mxu0 0.0
    %228 = vmatpush1.msra.mxu0 0.0
    %229 = vmatprep.subr.mxu0 0.0
    %230 = vmatpush1.msra.mxu0 0.0
    %231 = vmatprep.subr.mxu0 0.0
    %232 = vmatpush1.msra.mxu0 0.0
    %233 = vmatprep.mubr.f32.mxu0 0.0
    %234 = vmatmul.mubr.f32.gmra.mrb[0].mxu0 %v87
    %v235 = vpop.f32.mrb[0].mxu0
    %v236 = vadd.f32 0.0, %v235
    %v237 = vpop.f32.mrb[0].mxu0
    %v238 = vadd.f32 0.0, %v237
    %239 = vmatprep.mubr.f32.mxu0 0.0
    %240 = vmatmul.mubr.f32.gmra.mrb[0].mxu0 %v90
    %v241 = vpop.f32.mrb[0].mxu0
    %v242 = vadd.f32 0.0, %v241
    %v243 = vpop.f32.mrb[0].mxu0
    %v244 = vadd.f32 0.0, %v243
    %245 = vdwg.mxu0
    %246 = vmatprep.subr.mxu0 0.0
    %247 = vmatpush1.msra.mxu0 %v81
    %248 = vmatprep.subr.mxu0 0.0
    %249 = vmatpush1.msra.mxu0 %v82
    %250 = vmatprep.subr.mxu0 0.0
    %251 = vmatpush1.msra.mxu0 0.0
    %252 = vmatprep.subr.mxu0 0.0
    %253 = vmatpush1.msra.mxu0 0.0
    %254 = vmatprep.subr.mxu0 0.0
    %255 = vmatpush1.msra.mxu0 0.0
    %256 = vmatprep.subr.mxu0 0.0
    %257 = vmatpush1.msra.mxu0 0.0
    %258 = vmatprep.subr.mxu0 0.0
    %259 = vmatpush1.msra.mxu0 0.0
    %260 = vmatprep.subr.mxu0 0.0
    %261 = vmatpush1.msra.mxu0 0.0
    %262 = vmatprep.subr.mxu0 0.0
    %263 = vmatpush1.msra.mxu0 0.0
    %264 = vmatprep.subr.mxu0 0.0
    %265 = vmatpush1.msra.mxu0 0.0
    %266 = vmatprep.subr.mxu0 0.0
    %267 = vmatpush1.msra.mxu0 0.0
    %268 = vmatprep.subr.mxu0 0.0
    %269 = vmatpush1.msra.mxu0 0.0
    %270 = vmatprep.subr.mxu0 0.0
    %271 = vmatpush1.msra.mxu0 0.0
    %272 = vmatprep.subr.mxu0 0.0
    %273 = vmatpush1.msra.mxu0 0.0
    %274 = vmatprep.subr.mxu0 0.0
    %275 = vmatpush1.msra.mxu0 0.0
    %276 = vmatprep.subr.mxu0 0.0
    %277 = vmatpush1.msra.mxu0 0.0
    %278 = vmatprep.subr.mxu0 0.0
    %279 = vmatpush1.msra.mxu0 0.0
    %280 = vmatprep.subr.mxu0 0.0
    %281 = vmatpush1.msra.mxu0 0.0
    %282 = vmatprep.subr.mxu0 0.0
    %283 = vmatpush1.msra.mxu0 0.0
    %284 = vmatprep.subr.mxu0 0.0
    %285 = vmatpush1.msra.mxu0 0.0
    %286 = vmatprep.subr.mxu0 0.0
    %287 = vmatpush1.msra.mxu0 0.0
    %288 = vmatprep.subr.mxu0 0.0
    %289 = vmatpush1.msra.mxu0 0.0
    %290 = vmatprep.subr.mxu0 0.0
    %291 = vmatpush1.msra.mxu0 0.0
    %292 = vmatprep.subr.mxu0 0.0
    %293 = vmatpush1.msra.mxu0 0.0
    %294 = vmatprep.subr.mxu0 0.0
    %295 = vmatpush1.msra.mxu0 0.0
    %296 = vmatprep.subr.mxu0 0.0
    %297 = vmatpush1.msra.mxu0 0.0
    %298 = vmatprep.subr.mxu0 0.0
    %299 = vmatpush1.msra.mxu0 0.0
    %300 = vmatprep.subr.mxu0 0.0
    %301 = vmatpush1.msra.mxu0 0.0
    %302 = vmatprep.subr.mxu0 0.0
    %303 = vmatpush1.msra.mxu0 0.0
    %304 = vmatprep.subr.mxu0 0.0
    %305 = vmatpush1.msra.mxu0 0.0
    %306 = vmatprep.subr.mxu0 0.0
    %307 = vmatpush1.msra.mxu0 0.0
    %308 = vmatprep.subr.mxu0 0.0
    %309 = vmatpush1.msra.mxu0 0.0
    %310 = vmatprep.mubr.f32.mxu0 0.0
    %311 = vmatmul.mubr.f32.gmra.mrb[0].mxu0 %v87
    %v312 = vpop.f32.mrb[0].mxu0
    %v313 = vadd.f32 0.0, %v312
    %v314 = vpop.f32.mrb[0].mxu0
    %315 = vmatprep.mubr.f32.mxu0 0.0
    %316 = vmatmul.mubr.f32.gmra.mrb[0].mxu0 %v90
    %v317 = vpop.f32.mrb[0].mxu0
    %v318 = vadd.f32 0.0, %v317
    %v319 = vpop.f32.mrb[0].mxu0
    %320 = vdwg.mxu0
    %v321 = vld [vmem:[#allocation8] sm:$0xff]
    %v322 = vld [vmem:[#allocation8 + $0x8] sm:$0xff]
    %v323 = vld [vmem:[#allocation8 + $0x10] sm:$0xff]
    %v324 = vld [vmem:[#allocation8 + $0x18] sm:$0xff]
    %v325 = vld [vmem:[#allocation8 + $0x20] sm:$0xff]
    %v326 = vld [vmem:[#allocation8 + $0x28] sm:$0x7]
    %v327 = vld [vmem:[#allocation8 + $0x30] sm:$0x7]
    %v328 = vld [vmem:[#allocation8 + $0x38] sm:$0x7]
    %v329 = vld [vmem:[#allocation8 + $0x40] sm:$0x7]
    %v330 = vld [vmem:[#allocation8 + $0x48] sm:$0x7]
    %333 = vrot.lane.b32.xlu0 %v313, 5
    %v334 = vpop.permute.xlu0 %333
    %335 = vrot.lane.b32.xlu0 %v318, 5
    %v336 = vpop.permute.xlu0 %335
    %347 = vrot.lane.b32.xlu0 %v159, 5
    %v348 = vpop.permute.xlu0 %347
    %349 = vrot.lane.b32.xlu0 %v161, 5
    %v350 = vpop.permute.xlu0 %349
    %351 = vrot.lane.b32.xlu0 %v236, 5
    %v352 = vpop.permute.xlu0 %351
    %353 = vrot.lane.b32.xlu0 %v238, 5
    %v354 = vpop.permute.xlu0 %353
    %355 = vrot.lane.b32.xlu0 %v165, 5
    %v356 = vpop.permute.xlu0 %355
    %357 = vrot.lane.b32.xlu0 %v167, 5
    %v358 = vpop.permute.xlu0 %357
    %359 = vrot.lane.b32.xlu0 %v242, 5
    %v360 = vpop.permute.xlu0 %359
    %361 = vrot.lane.b32.xlu0 %v244, 5
    %v362 = vpop.permute.xlu0 %361
    %vm363 = vcmask 39936
    %v364 = vsel %vm363, %v348, %v350
    %v365 = vsel %vm363, %v350, %v352
    %v366 = vsel %vm363, %v352, %v354
    %v367 = vsel %vm363, %v354, %v334
    %v368 = vsel %vm363, %v356, %v358
    %v369 = vsel %vm363, %v358, %v360
    %v370 = vsel %vm363, %v360, %v362
    %v371 = vsel %vm363, %v362, %v336
    %v382 = vsel %vm363, %v334, %v348
    %v383 = vsel %vm363, %v336, %v356
    %v384 = vlaneseq
    %v385 = vshrl.u32 %v384, 7
    %v386 = vsub.s32 0, %v385
    %v387 = vrot.slane %v321, %v386
    %v388 = vlaneseq
    %v389 = vshrl.u32 %v388, 7
    %v390 = vsub.s32 0, %v389
    %v391 = vrot.slane %v322, %v390
    %v392 = vlaneseq
    %v393 = vshrl.u32 %v392, 7
    %v394 = vsub.s32 0, %v393
    %v395 = vrot.slane %v323, %v394
    %v396 = vlaneseq
    %v397 = vshrl.u32 %v396, 7
    %v398 = vsub.s32 0, %v397
    %v399 = vrot.slane %v324, %v398
    %v400 = vlaneseq
    %v401 = vshrl.u32 %v400, 7
    %v402 = vsub.s32 0, %v401
    %v403 = vrot.slane %v325, %v402
    %v404 = vmul.f32 %v387, %v382
    %v405 = vmul.f32 %v391, %v364
    %v406 = vmul.f32 %v395, %v365
    %v407 = vmul.f32 %v399, %v366
    %v408 = vmul.f32 %v403, %v367
    %v409 = vmul.f32 %v387, %v383
    %v410 = vmul.f32 %v391, %v368
    %v411 = vmul.f32 %v395, %v369
    %v412 = vmul.f32 %v399, %v370
    %v413 = vmul.f32 %v403, %v371
    %414 = vrot.lane.b32.xlu0 %v313, 4
    %v415 = vpop.permute.xlu0 %414
    %416 = vrot.lane.b32.xlu0 %v318, 4
    %v417 = vpop.permute.xlu0 %416
    %420 = vrot.lane.b32.xlu0 %v159, 4
    %v421 = vpop.permute.xlu0 %420
    %422 = vrot.lane.b32.xlu0 %v161, 4
    %v423 = vpop.permute.xlu0 %422
    %424 = vrot.lane.b32.xlu0 %v236, 4
    %v425 = vpop.permute.xlu0 %424
    %426 = vrot.lane.b32.xlu0 %v238, 4
    %v427 = vpop.permute.xlu0 %426
    %428 = vrot.lane.b32.xlu0 %v165, 4
    %v429 = vpop.permute.xlu0 %428
    %430 = vrot.lane.b32.xlu0 %v167, 4
    %v431 = vpop.permute.xlu0 %430
    %432 = vrot.lane.b32.xlu0 %v242, 4
    %v433 = vpop.permute.xlu0 %432
    %434 = vrot.lane.b32.xlu0 %v244, 4
    %v435 = vpop.permute.xlu0 %434
    %vm436 = vcmask 31744
    %v437 = vsel %vm436, %v421, %v423
    %v438 = vsel %vm436, %v423, %v425
    %v439 = vsel %vm436, %v425, %v427
    %v440 = vsel %vm436, %v427, %v415
    %v441 = vsel %vm436, %v429, %v431
    %v442 = vsel %vm436, %v431, %v433
    %v443 = vsel %vm436, %v433, %v435
    %v444 = vsel %vm436, %v435, %v417
    %v455 = vsel %vm436, %v415, %v421
    %v456 = vsel %vm436, %v417, %v429
    %v457 = vlaneseq
    %v458 = vshrl.u32 %v457, 7
    %v459 = vsub.s32 1, %v458
    %v460 = vrot.slane %v321, %v459
    %v461 = vlaneseq
    %v462 = vshrl.u32 %v461, 7
    %v463 = vsub.s32 1, %v462
    %v464 = vrot.slane %v322, %v463
    %v465 = vlaneseq
    %v466 = vshrl.u32 %v465, 7
    %v467 = vsub.s32 1, %v466
    %v468 = vrot.slane %v323, %v467
    %v469 = vlaneseq
    %v470 = vshrl.u32 %v469, 7
    %v471 = vsub.s32 1, %v470
    %v472 = vrot.slane %v324, %v471
    %v473 = vlaneseq
    %v474 = vshrl.u32 %v473, 7
    %v475 = vsub.s32 1, %v474
    %v476 = vrot.slane %v325, %v475
    %v477 = vmul.f32 %v460, %v455
    %v478 = vmul.f32 %v464, %v437
    %v479 = vmul.f32 %v468, %v438
    %v480 = vmul.f32 %v472, %v439
    %v481 = vmul.f32 %v476, %v440
    %v482 = vmul.f32 %v460, %v456
    %v483 = vmul.f32 %v464, %v441
    %v484 = vmul.f32 %v468, %v442
    %v485 = vmul.f32 %v472, %v443
    %v486 = vmul.f32 %v476, %v444
    %v487 = vadd.f32 %v404, %v477
    %v488 = vadd.f32 %v405, %v478
    %v489 = vadd.f32 %v406, %v479
    %v490 = vadd.f32 %v407, %v480
    %v491 = vadd.f32 %v408, %v481
    %v492 = vadd.f32 %v409, %v482
    %v493 = vadd.f32 %v410, %v483
    %v494 = vadd.f32 %v411, %v484
    %v495 = vadd.f32 %v412, %v485
    %v496 = vadd.f32 %v413, %v486
    %497 = vrot.lane.b32.xlu0 %v313, 3
    %v498 = vpop.permute.xlu0 %497
    %499 = vrot.lane.b32.xlu0 %v318, 3
    %v500 = vpop.permute.xlu0 %499
    %503 = vrot.lane.b32.xlu0 %v159, 3
    %v504 = vpop.permute.xlu0 %503
    %505 = vrot.lane.b32.xlu0 %v161, 3
    %v506 = vpop.permute.xlu0 %505
    %507 = vrot.lane.b32.xlu0 %v236, 3
    %v508 = vpop.permute.xlu0 %507
    %509 = vrot.lane.b32.xlu0 %v238, 3
    %v510 = vpop.permute.xlu0 %509
    %511 = vrot.lane.b32.xlu0 %v165, 3
    %v512 = vpop.permute.xlu0 %511
    %513 = vrot.lane.b32.xlu0 %v167, 3
    %v514 = vpop.permute.xlu0 %513
    %515 = vrot.lane.b32.xlu0 %v242, 3
    %v516 = vpop.permute.xlu0 %515
    %517 = vrot.lane.b32.xlu0 %v244, 3
    %v518 = vpop.permute.xlu0 %517
    %vm519 = vcmask 23552
    %v520 = vsel %vm519, %v504, %v506
    %v521 = vsel %vm519, %v506, %v508
    %v522 = vsel %vm519, %v508, %v510
    %v523 = vsel %vm519, %v510, %v498
    %v524 = vsel %vm519, %v512, %v514
    %v525 = vsel %vm519, %v514, %v516
    %v526 = vsel %vm519, %v516, %v518
    %v527 = vsel %vm519, %v518, %v500
    %v538 = vsel %vm519, %v498, %v504
    %v539 = vsel %vm519, %v500, %v512
    %v540 = vlaneseq
    %v541 = vshrl.u32 %v540, 7
    %v542 = vsub.s32 2, %v541
    %v543 = vrot.slane %v321, %v542
    %v544 = vlaneseq
    %v545 = vshrl.u32 %v544, 7
    %v546 = vsub.s32 2, %v545
    %v547 = vrot.slane %v322, %v546
    %v548 = vlaneseq
    %v549 = vshrl.u32 %v548, 7
    %v550 = vsub.s32 2, %v549
    %v551 = vrot.slane %v323, %v550
    %v552 = vlaneseq
    %v553 = vshrl.u32 %v552, 7
    %v554 = vsub.s32 2, %v553
    %v555 = vrot.slane %v324, %v554
    %v556 = vlaneseq
    %v557 = vshrl.u32 %v556, 7
    %v558 = vsub.s32 2, %v557
    %v559 = vrot.slane %v325, %v558
    %v560 = vmul.f32 %v543, %v538
    %v561 = vmul.f32 %v547, %v520
    %v562 = vmul.f32 %v551, %v521
    %v563 = vmul.f32 %v555, %v522
    %v564 = vmul.f32 %v559, %v523
    %v565 = vmul.f32 %v543, %v539
    %v566 = vmul.f32 %v547, %v524
    %v567 = vmul.f32 %v551, %v525
    %v568 = vmul.f32 %v555, %v526
    %v569 = vmul.f32 %v559, %v527
    %v570 = vadd.f32 %v487, %v560
    %v571 = vadd.f32 %v488, %v561
    %v572 = vadd.f32 %v489, %v562
    %v573 = vadd.f32 %v490, %v563
    %v574 = vadd.f32 %v491, %v564
    %v575 = vadd.f32 %v492, %v565
    %v576 = vadd.f32 %v493, %v566
    %v577 = vadd.f32 %v494, %v567
    %v578 = vadd.f32 %v495, %v568
    %v579 = vadd.f32 %v496, %v569
    %580 = vrot.lane.b32.xlu0 %v313, 2
    %v581 = vpop.permute.xlu0 %580
    %582 = vrot.lane.b32.xlu0 %v318, 2
    %v583 = vpop.permute.xlu0 %582
    %586 = vrot.lane.b32.xlu0 %v159, 2
    %v587 = vpop.permute.xlu0 %586
    %588 = vrot.lane.b32.xlu0 %v161, 2
    %v589 = vpop.permute.xlu0 %588
    %590 = vrot.lane.b32.xlu0 %v236, 2
    %v591 = vpop.permute.xlu0 %590
    %592 = vrot.lane.b32.xlu0 %v238, 2
    %v593 = vpop.permute.xlu0 %592
    %594 = vrot.lane.b32.xlu0 %v165, 2
    %v595 = vpop.permute.xlu0 %594
    %596 = vrot.lane.b32.xlu0 %v167, 2
    %v597 = vpop.permute.xlu0 %596
    %598 = vrot.lane.b32.xlu0 %v242, 2
    %v599 = vpop.permute.xlu0 %598
    %600 = vrot.lane.b32.xlu0 %v244, 2
    %v601 = vpop.permute.xlu0 %600
    %vm602 = vcmask 15360
    %v603 = vsel %vm602, %v587, %v589
    %v604 = vsel %vm602, %v589, %v591
    %v605 = vsel %vm602, %v591, %v593
    %v606 = vsel %vm602, %v593, %v581
    %v607 = vsel %vm602, %v595, %v597
    %v608 = vsel %vm602, %v597, %v599
    %v609 = vsel %vm602, %v599, %v601
    %v610 = vsel %vm602, %v601, %v583
    %v621 = vsel %vm602, %v581, %v587
    %v622 = vsel %vm602, %v583, %v595
    %v623 = vlaneseq
    %v624 = vshrl.u32 %v623, 7
    %v625 = vsub.s32 3, %v624
    %v626 = vrot.slane %v321, %v625
    %v627 = vlaneseq
    %v628 = vshrl.u32 %v627, 7
    %v629 = vsub.s32 3, %v628
    %v630 = vrot.slane %v322, %v629
    %v631 = vlaneseq
    %v632 = vshrl.u32 %v631, 7
    %v633 = vsub.s32 3, %v632
    %v634 = vrot.slane %v323, %v633
    %v635 = vlaneseq
    %v636 = vshrl.u32 %v635, 7
    %v637 = vsub.s32 3, %v636
    %v638 = vrot.slane %v324, %v637
    %v639 = vlaneseq
    %v640 = vshrl.u32 %v639, 7
    %v641 = vsub.s32 3, %v640
    %v642 = vrot.slane %v325, %v641
    %v643 = vmul.f32 %v626, %v621
    %v644 = vmul.f32 %v630, %v603
    %v645 = vmul.f32 %v634, %v604
    %v646 = vmul.f32 %v638, %v605
    %v647 = vmul.f32 %v642, %v606
    %v648 = vmul.f32 %v626, %v622
    %v649 = vmul.f32 %v630, %v607
    %v650 = vmul.f32 %v634, %v608
    %v651 = vmul.f32 %v638, %v609
    %v652 = vmul.f32 %v642, %v610
    %v653 = vadd.f32 %v570, %v643
    %v654 = vadd.f32 %v571, %v644
    %v655 = vadd.f32 %v572, %v645
    %v656 = vadd.f32 %v573, %v646
    %v657 = vadd.f32 %v574, %v647
    %v658 = vadd.f32 %v575, %v648
    %v659 = vadd.f32 %v576, %v649
    %v660 = vadd.f32 %v577, %v650
    %v661 = vadd.f32 %v578, %v651
    %v662 = vadd.f32 %v579, %v652
    %663 = vrot.lane.b32.xlu0 %v313, 1
    %v664 = vpop.permute.xlu0 %663
    %665 = vrot.lane.b32.xlu0 %v318, 1
    %v666 = vpop.permute.xlu0 %665
    %669 = vrot.lane.b32.xlu0 %v159, 1
    %v670 = vpop.permute.xlu0 %669
    %671 = vrot.lane.b32.xlu0 %v161, 1
    %v672 = vpop.permute.xlu0 %671
    %673 = vrot.lane.b32.xlu0 %v236, 1
    %v674 = vpop.permute.xlu0 %673
    %675 = vrot.lane.b32.xlu0 %v238, 1
    %v676 = vpop.permute.xlu0 %675
    %677 = vrot.lane.b32.xlu0 %v165, 1
    %v678 = vpop.permute.xlu0 %677
    %679 = vrot.lane.b32.xlu0 %v167, 1
    %v680 = vpop.permute.xlu0 %679
    %681 = vrot.lane.b32.xlu0 %v242, 1
    %v682 = vpop.permute.xlu0 %681
    %683 = vrot.lane.b32.xlu0 %v244, 1
    %v684 = vpop.permute.xlu0 %683
    %vm685 = vcmask 7168
    %v686 = vsel %vm685, %v670, %v672
    %v687 = vsel %vm685, %v672, %v674
    %v688 = vsel %vm685, %v674, %v676
    %v689 = vsel %vm685, %v676, %v664
    %v690 = vsel %vm685, %v678, %v680
    %v691 = vsel %vm685, %v680, %v682
    %v692 = vsel %vm685, %v682, %v684
    %v693 = vsel %vm685, %v684, %v666
    %v704 = vsel %vm685, %v664, %v670
    %v705 = vsel %vm685, %v666, %v678
    %v706 = vlaneseq
    %v707 = vshrl.u32 %v706, 7
    %v708 = vsub.s32 4, %v707
    %v709 = vrot.slane %v321, %v708
    %v710 = vlaneseq
    %v711 = vshrl.u32 %v710, 7
    %v712 = vsub.s32 4, %v711
    %v713 = vrot.slane %v322, %v712
    %v714 = vlaneseq
    %v715 = vshrl.u32 %v714, 7
    %v716 = vsub.s32 4, %v715
    %v717 = vrot.slane %v323, %v716
    %v718 = vlaneseq
    %v719 = vshrl.u32 %v718, 7
    %v720 = vsub.s32 4, %v719
    %v721 = vrot.slane %v324, %v720
    %v722 = vlaneseq
    %v723 = vshrl.u32 %v722, 7
    %v724 = vsub.s32 4, %v723
    %v725 = vrot.slane %v325, %v724
    %v726 = vmul.f32 %v709, %v704
    %v727 = vmul.f32 %v713, %v686
    %v728 = vmul.f32 %v717, %v687
    %v729 = vmul.f32 %v721, %v688
    %v730 = vmul.f32 %v725, %v689
    %v731 = vmul.f32 %v709, %v705
    %v732 = vmul.f32 %v713, %v690
    %v733 = vmul.f32 %v717, %v691
    %v734 = vmul.f32 %v721, %v692
    %v735 = vmul.f32 %v725, %v693
    %v736 = vadd.f32 %v653, %v726
    %v737 = vadd.f32 %v654, %v727
    %v738 = vadd.f32 %v655, %v728
    %v739 = vadd.f32 %v656, %v729
    %v740 = vadd.f32 %v657, %v730
    %v741 = vadd.f32 %v658, %v731
    %v742 = vadd.f32 %v659, %v732
    %v743 = vadd.f32 %v660, %v733
    %v744 = vadd.f32 %v661, %v734
    %v745 = vadd.f32 %v662, %v735
    %v746 = vlaneseq
    %v747 = vshrl.u32 %v746, 7
    %v748 = vsub.s32 5, %v747
    %v749 = vrot.slane %v321, %v748
    %v750 = vlaneseq
    %v751 = vshrl.u32 %v750, 7
    %v752 = vsub.s32 5, %v751
    %v753 = vrot.slane %v322, %v752
    %v754 = vlaneseq
    %v755 = vshrl.u32 %v754, 7
    %v756 = vsub.s32 5, %v755
    %v757 = vrot.slane %v323, %v756
    %v758 = vlaneseq
    %v759 = vshrl.u32 %v758, 7
    %v760 = vsub.s32 5, %v759
    %v761 = vrot.slane %v324, %v760
    %v762 = vlaneseq
    %v763 = vshrl.u32 %v762, 7
    %v764 = vsub.s32 5, %v763
    %v765 = vrot.slane %v325, %v764
    %v766 = vmul.f32 %v749, %v159
    %v767 = vmul.f32 %v753, %v161
    %v768 = vmul.f32 %v757, %v236
    %v769 = vmul.f32 %v761, %v238
    %v770 = vmul.f32 %v765, %v313
    %v771 = vmul.f32 %v749, %v165
    %v772 = vmul.f32 %v753, %v167
    %v773 = vmul.f32 %v757, %v242
    %v774 = vmul.f32 %v761, %v244
    %v775 = vmul.f32 %v765, %v318
    %v776 = vadd.f32 %v736, %v766
    %v777 = vadd.f32 %v737, %v767
    %v778 = vadd.f32 %v738, %v768
    %v779 = vadd.f32 %v739, %v769
    %v780 = vadd.f32 %v740, %v770
    %v781 = vadd.f32 %v741, %v771
    %v782 = vadd.f32 %v742, %v772
    %v783 = vadd.f32 %v743, %v773
    %v784 = vadd.f32 %v744, %v774
    %v785 = vadd.f32 %v745, %v775
    %786 = vrot.lane.b32.xlu0 %v159, 127
    %v787 = vpop.permute.xlu0 %786
    %788 = vrot.lane.b32.xlu0 %v161, 127
    %v789 = vpop.permute.xlu0 %788
    %790 = vrot.lane.b32.xlu0 %v236, 127
    %v791 = vpop.permute.xlu0 %790
    %792 = vrot.lane.b32.xlu0 %v238, 127
    %v793 = vpop.permute.xlu0 %792
    %794 = vrot.lane.b32.xlu0 %v313, 127
    %v795 = vpop.permute.xlu0 %794
    %796 = vrot.lane.b32.xlu0 %v165, 127
    %v797 = vpop.permute.xlu0 %796
    %798 = vrot.lane.b32.xlu0 %v167, 127
    %v799 = vpop.permute.xlu0 %798
    %800 = vrot.lane.b32.xlu0 %v242, 127
    %v801 = vpop.permute.xlu0 %800
    %802 = vrot.lane.b32.xlu0 %v244, 127
    %v803 = vpop.permute.xlu0 %802
    %804 = vrot.lane.b32.xlu0 %v318, 127
    %v805 = vpop.permute.xlu0 %804
    %vm806 = vcmask 1039360
    %v807 = vsel %vm806, %v787, %v789
    %v808 = vsel %vm806, %v789, %v791
    %v809 = vsel %vm806, %v791, %v793
    %v810 = vsel %vm806, %v793, %v795
    %v811 = vsel %vm806, %v797, %v799
    %v812 = vsel %vm806, %v799, %v801
    %v813 = vsel %vm806, %v801, %v803
    %v814 = vsel %vm806, %v803, %v805
    %v827 = vsel %vm806, %v795, %v787
    %v828 = vsel %vm806, %v805, %v797
    %v829 = vlaneseq
    %v830 = vshrl.u32 %v829, 7
    %v831 = vsub.s32 6, %v830
    %v832 = vrot.slane %v321, %v831
    %v833 = vlaneseq
    %v834 = vshrl.u32 %v833, 7
    %v835 = vsub.s32 6, %v834
    %v836 = vrot.slane %v322, %v835
    %v837 = vlaneseq
    %v838 = vshrl.u32 %v837, 7
    %v839 = vsub.s32 6, %v838
    %v840 = vrot.slane %v323, %v839
    %v841 = vlaneseq
    %v842 = vshrl.u32 %v841, 7
    %v843 = vsub.s32 6, %v842
    %v844 = vrot.slane %v324, %v843
    %v845 = vlaneseq
    %v846 = vshrl.u32 %v845, 7
    %v847 = vsub.s32 6, %v846
    %v848 = vrot.slane %v325, %v847
    %v849 = vmul.f32 %v832, %v807
    %v850 = vmul.f32 %v836, %v808
    %v851 = vmul.f32 %v840, %v809
    %v852 = vmul.f32 %v844, %v810
    %v853 = vmul.f32 %v848, %v827
    %v854 = vmul.f32 %v832, %v811
    %v855 = vmul.f32 %v836, %v812
    %v856 = vmul.f32 %v840, %v813
    %v857 = vmul.f32 %v844, %v814
    %v858 = vmul.f32 %v848, %v828
    %v859 = vadd.f32 %v776, %v849
    %v860 = vadd.f32 %v777, %v850
    %v861 = vadd.f32 %v778, %v851
    %v862 = vadd.f32 %v779, %v852
    %v863 = vadd.f32 %v780, %v853
    %v864 = vadd.f32 %v781, %v854
    %v865 = vadd.f32 %v782, %v855
    %v866 = vadd.f32 %v783, %v856
    %v867 = vadd.f32 %v784, %v857
    %v868 = vadd.f32 %v785, %v858
    %869 = vrot.lane.b32.xlu0 %v159, 126
    %v870 = vpop.permute.xlu0 %869
    %871 = vrot.lane.b32.xlu0 %v161, 126
    %v872 = vpop.permute.xlu0 %871
    %873 = vrot.lane.b32.xlu0 %v236, 126
    %v874 = vpop.permute.xlu0 %873
    %875 = vrot.lane.b32.xlu0 %v238, 126
    %v876 = vpop.permute.xlu0 %875
    %877 = vrot.lane.b32.xlu0 %v313, 126
    %v878 = vpop.permute.xlu0 %877
    %879 = vrot.lane.b32.xlu0 %v165, 126
    %v880 = vpop.permute.xlu0 %879
    %881 = vrot.lane.b32.xlu0 %v167, 126
    %v882 = vpop.permute.xlu0 %881
    %883 = vrot.lane.b32.xlu0 %v242, 126
    %v884 = vpop.permute.xlu0 %883
    %885 = vrot.lane.b32.xlu0 %v244, 126
    %v886 = vpop.permute.xlu0 %885
    %887 = vrot.lane.b32.xlu0 %v318, 126
    %v888 = vpop.permute.xlu0 %887
    %vm889 = vcmask 1031168
    %v890 = vsel %vm889, %v870, %v872
    %v891 = vsel %vm889, %v872, %v874
    %v892 = vsel %vm889, %v874, %v876
    %v893 = vsel %vm889, %v876, %v878
    %v894 = vsel %vm889, %v880, %v882
    %v895 = vsel %vm889, %v882, %v884
    %v896 = vsel %vm889, %v884, %v886
    %v897 = vsel %vm889, %v886, %v888
    %v910 = vsel %vm889, %v878, %v870
    %v911 = vsel %vm889, %v888, %v880
    %v912 = vlaneseq
    %v913 = vshrl.u32 %v912, 7
    %v914 = vsub.s32 7, %v913
    %v915 = vrot.slane %v321, %v914
    %v916 = vlaneseq
    %v917 = vshrl.u32 %v916, 7
    %v918 = vsub.s32 7, %v917
    %v919 = vrot.slane %v322, %v918
    %v920 = vlaneseq
    %v921 = vshrl.u32 %v920, 7
    %v922 = vsub.s32 7, %v921
    %v923 = vrot.slane %v323, %v922
    %v924 = vlaneseq
    %v925 = vshrl.u32 %v924, 7
    %v926 = vsub.s32 7, %v925
    %v927 = vrot.slane %v324, %v926
    %v928 = vlaneseq
    %v929 = vshrl.u32 %v928, 7
    %v930 = vsub.s32 7, %v929
    %v931 = vrot.slane %v325, %v930
    %v932 = vmul.f32 %v915, %v890
    %v933 = vmul.f32 %v919, %v891
    %v934 = vmul.f32 %v923, %v892
    %v935 = vmul.f32 %v927, %v893
    %v936 = vmul.f32 %v931, %v910
    %v937 = vmul.f32 %v915, %v894
    %v938 = vmul.f32 %v919, %v895
    %v939 = vmul.f32 %v923, %v896
    %v940 = vmul.f32 %v927, %v897
    %v941 = vmul.f32 %v931, %v911
    %v942 = vadd.f32 %v859, %v932
    %v943 = vadd.f32 %v860, %v933
    %v944 = vadd.f32 %v861, %v934
    %v945 = vadd.f32 %v862, %v935
    %v946 = vadd.f32 %v863, %v936
    %v947 = vadd.f32 %v864, %v937
    %v948 = vadd.f32 %v865, %v938
    %v949 = vadd.f32 %v866, %v939
    %v950 = vadd.f32 %v867, %v940
    %v951 = vadd.f32 %v868, %v941
    %952 = vrot.lane.b32.xlu0 %v159, 125
    %v953 = vpop.permute.xlu0 %952
    %954 = vrot.lane.b32.xlu0 %v161, 125
    %v955 = vpop.permute.xlu0 %954
    %956 = vrot.lane.b32.xlu0 %v236, 125
    %v957 = vpop.permute.xlu0 %956
    %958 = vrot.lane.b32.xlu0 %v238, 125
    %v959 = vpop.permute.xlu0 %958
    %960 = vrot.lane.b32.xlu0 %v313, 125
    %v961 = vpop.permute.xlu0 %960
    %962 = vrot.lane.b32.xlu0 %v165, 125
    %v963 = vpop.permute.xlu0 %962
    %964 = vrot.lane.b32.xlu0 %v167, 125
    %v965 = vpop.permute.xlu0 %964
    %966 = vrot.lane.b32.xlu0 %v242, 125
    %v967 = vpop.permute.xlu0 %966
    %968 = vrot.lane.b32.xlu0 %v244, 125
    %v969 = vpop.permute.xlu0 %968
    %970 = vrot.lane.b32.xlu0 %v318, 125
    %v971 = vpop.permute.xlu0 %970
    %vm972 = vcmask 1022976
    %v973 = vsel %vm972, %v953, %v955
    %v974 = vsel %vm972, %v955, %v957
    %v975 = vsel %vm972, %v957, %v959
    %v976 = vsel %vm972, %v959, %v961
    %v977 = vsel %vm972, %v963, %v965
    %v978 = vsel %vm972, %v965, %v967
    %v979 = vsel %vm972, %v967, %v969
    %v980 = vsel %vm972, %v969, %v971
    %v993 = vsel %vm972, %v961, %v953
    %v994 = vsel %vm972, %v971, %v963
    %v995 = vlaneseq
    %v996 = vshrl.u32 %v995, 7
    %v997 = vsub.s32 0, %v996
    %v998 = vrot.slane %v326, %v997
    %v999 = vlaneseq
    %v1000 = vshrl.u32 %v999, 7
    %v1001 = vsub.s32 0, %v1000
    %v1002 = vrot.slane %v327, %v1001
    %v1003 = vlaneseq
    %v1004 = vshrl.u32 %v1003, 7
    %v1005 = vsub.s32 0, %v1004
    %v1006 = vrot.slane %v328, %v1005
    %v1007 = vlaneseq
    %v1008 = vshrl.u32 %v1007, 7
    %v1009 = vsub.s32 0, %v1008
    %v1010 = vrot.slane %v329, %v1009
    %v1011 = vlaneseq
    %v1012 = vshrl.u32 %v1011, 7
    %v1013 = vsub.s32 0, %v1012
    %v1014 = vrot.slane %v330, %v1013
    %v1015 = vmul.f32 %v998, %v973
    %v1016 = vmul.f32 %v1002, %v974
    %v1017 = vmul.f32 %v1006, %v975
    %v1018 = vmul.f32 %v1010, %v976
    %v1019 = vmul.f32 %v1014, %v993
    %v1020 = vmul.f32 %v998, %v977
    %v1021 = vmul.f32 %v1002, %v978
    %v1022 = vmul.f32 %v1006, %v979
    %v1023 = vmul.f32 %v1010, %v980
    %v1024 = vmul.f32 %v1014, %v994
    %v1025 = vadd.f32 %v942, %v1015
    %v1026 = vadd.f32 %v943, %v1016
    %v1027 = vadd.f32 %v944, %v1017
    %v1028 = vadd.f32 %v945, %v1018
    %v1029 = vadd.f32 %v946, %v1019
    %v1030 = vadd.f32 %v947, %v1020
    %v1031 = vadd.f32 %v948, %v1021
    %v1032 = vadd.f32 %v949, %v1022
    %v1033 = vadd.f32 %v950, %v1023
    %v1034 = vadd.f32 %v951, %v1024
    %1035 = vrot.lane.b32.xlu0 %v159, 124
    %v1036 = vpop.permute.xlu0 %1035
    %1037 = vrot.lane.b32.xlu0 %v161, 124
    %v1038 = vpop.permute.xlu0 %1037
    %1039 = vrot.lane.b32.xlu0 %v236, 124
    %v1040 = vpop.permute.xlu0 %1039
    %1041 = vrot.lane.b32.xlu0 %v238, 124
    %v1042 = vpop.permute.xlu0 %1041
    %1043 = vrot.lane.b32.xlu0 %v313, 124
    %v1044 = vpop.permute.xlu0 %1043
    %1045 = vrot.lane.b32.xlu0 %v165, 124
    %v1046 = vpop.permute.xlu0 %1045
    %1047 = vrot.lane.b32.xlu0 %v167, 124
    %v1048 = vpop.permute.xlu0 %1047
    %1049 = vrot.lane.b32.xlu0 %v242, 124
    %v1050 = vpop.permute.xlu0 %1049
    %1051 = vrot.lane.b32.xlu0 %v244, 124
    %v1052 = vpop.permute.xlu0 %1051
    %1053 = vrot.lane.b32.xlu0 %v318, 124
    %v1054 = vpop.permute.xlu0 %1053
    %vm1055 = vcmask 1014784
    %v1056 = vsel %vm1055, %v1036, %v1038
    %v1057 = vsel %vm1055, %v1038, %v1040
    %v1058 = vsel %vm1055, %v1040, %v1042
    %v1059 = vsel %vm1055, %v1042, %v1044
    %v1060 = vsel %vm1055, %v1046, %v1048
    %v1061 = vsel %vm1055, %v1048, %v1050
    %v1062 = vsel %vm1055, %v1050, %v1052
    %v1063 = vsel %vm1055, %v1052, %v1054
    %v1076 = vsel %vm1055, %v1044, %v1036
    %v1077 = vsel %vm1055, %v1054, %v1046
    %v1078 = vlaneseq
    %v1079 = vshrl.u32 %v1078, 7
    %v1080 = vsub.s32 1, %v1079
    %v1081 = vrot.slane %v326, %v1080
    %v1082 = vlaneseq
    %v1083 = vshrl.u32 %v1082, 7
    %v1084 = vsub.s32 1, %v1083
    %v1085 = vrot.slane %v327, %v1084
    %v1086 = vlaneseq
    %v1087 = vshrl.u32 %v1086, 7
    %v1088 = vsub.s32 1, %v1087
    %v1089 = vrot.slane %v328, %v1088
    %v1090 = vlaneseq
    %v1091 = vshrl.u32 %v1090, 7
    %v1092 = vsub.s32 1, %v1091
    %v1093 = vrot.slane %v329, %v1092
    %v1094 = vlaneseq
    %v1095 = vshrl.u32 %v1094, 7
    %v1096 = vsub.s32 1, %v1095
    %v1097 = vrot.slane %v330, %v1096
    %v1098 = vmul.f32 %v1081, %v1056
    %v1099 = vmul.f32 %v1085, %v1057
    %v1100 = vmul.f32 %v1089, %v1058
    %v1101 = vmul.f32 %v1093, %v1059
    %v1102 = vmul.f32 %v1097, %v1076
    %v1103 = vmul.f32 %v1081, %v1060
    %v1104 = vmul.f32 %v1085, %v1061
    %v1105 = vmul.f32 %v1089, %v1062
    %v1106 = vmul.f32 %v1093, %v1063
    %v1107 = vmul.f32 %v1097, %v1077
    %v1108 = vadd.f32 %v1025, %v1098
    %v1109 = vadd.f32 %v1026, %v1099
    %v1110 = vadd.f32 %v1027, %v1100
    %v1111 = vadd.f32 %v1028, %v1101
    %v1112 = vadd.f32 %v1029, %v1102
    %v1113 = vadd.f32 %v1030, %v1103
    %v1114 = vadd.f32 %v1031, %v1104
    %v1115 = vadd.f32 %v1032, %v1105
    %v1116 = vadd.f32 %v1033, %v1106
    %v1117 = vadd.f32 %v1034, %v1107
    %1118 = vrot.lane.b32.xlu0 %v159, 123
    %v1119 = vpop.permute.xlu0 %1118
    %1120 = vrot.lane.b32.xlu0 %v161, 123
    %v1121 = vpop.permute.xlu0 %1120
    %1122 = vrot.lane.b32.xlu0 %v236, 123
    %v1123 = vpop.permute.xlu0 %1122
    %1124 = vrot.lane.b32.xlu0 %v238, 123
    %v1125 = vpop.permute.xlu0 %1124
    %1126 = vrot.lane.b32.xlu0 %v313, 123
    %v1127 = vpop.permute.xlu0 %1126
    %1128 = vrot.lane.b32.xlu0 %v165, 123
    %v1129 = vpop.permute.xlu0 %1128
    %1130 = vrot.lane.b32.xlu0 %v167, 123
    %v1131 = vpop.permute.xlu0 %1130
    %1132 = vrot.lane.b32.xlu0 %v242, 123
    %v1133 = vpop.permute.xlu0 %1132
    %1134 = vrot.lane.b32.xlu0 %v244, 123
    %v1135 = vpop.permute.xlu0 %1134
    %1136 = vrot.lane.b32.xlu0 %v318, 123
    %v1137 = vpop.permute.xlu0 %1136
    %vm1138 = vcmask 1006592
    %v1139 = vsel %vm1138, %v1119, %v1121
    %v1140 = vsel %vm1138, %v1121, %v1123
    %v1141 = vsel %vm1138, %v1123, %v1125
    %v1142 = vsel %vm1138, %v1125, %v1127
    %v1143 = vsel %vm1138, %v1129, %v1131
    %v1144 = vsel %vm1138, %v1131, %v1133
    %v1145 = vsel %vm1138, %v1133, %v1135
    %v1146 = vsel %vm1138, %v1135, %v1137
    %v1159 = vsel %vm1138, %v1127, %v1119
    %v1160 = vsel %vm1138, %v1137, %v1129
    %v1161 = vlaneseq
    %v1162 = vshrl.u32 %v1161, 7
    %v1163 = vsub.s32 2, %v1162
    %v1164 = vrot.slane %v326, %v1163
    %v1165 = vlaneseq
    %v1166 = vshrl.u32 %v1165, 7
    %v1167 = vsub.s32 2, %v1166
    %v1168 = vrot.slane %v327, %v1167
    %v1169 = vlaneseq
    %v1170 = vshrl.u32 %v1169, 7
    %v1171 = vsub.s32 2, %v1170
    %v1172 = vrot.slane %v328, %v1171
    %v1173 = vlaneseq
    %v1174 = vshrl.u32 %v1173, 7
    %v1175 = vsub.s32 2, %v1174
    %v1176 = vrot.slane %v329, %v1175
    %v1177 = vlaneseq
    %v1178 = vshrl.u32 %v1177, 7
    %v1179 = vsub.s32 2, %v1178
    %v1180 = vrot.slane %v330, %v1179
    %v1181 = vmul.f32 %v1164, %v1139
    %v1182 = vmul.f32 %v1168, %v1140
    %v1183 = vmul.f32 %v1172, %v1141
    %v1184 = vmul.f32 %v1176, %v1142
    %v1185 = vmul.f32 %v1180, %v1159
    %v1186 = vmul.f32 %v1164, %v1143
    %v1187 = vmul.f32 %v1168, %v1144
    %v1188 = vmul.f32 %v1172, %v1145
    %v1189 = vmul.f32 %v1176, %v1146
    %v1190 = vmul.f32 %v1180, %v1160
    %v1191 = vadd.f32 %v1108, %v1181
    %v1192 = vadd.f32 %v1109, %v1182
    %v1193 = vadd.f32 %v1110, %v1183
    %v1194 = vadd.f32 %v1111, %v1184
    %v1195 = vadd.f32 %v1112, %v1185
    %v1196 = vadd.f32 %v1113, %v1186
    %v1197 = vadd.f32 %v1114, %v1187
    %v1198 = vadd.f32 %v1115, %v1188
    %v1199 = vadd.f32 %v1116, %v1189
    %v1200 = vadd.f32 %v1117, %v1190
    %v1201 = vmul.f32 %v1191, %v1191
    %v1202 = vmul.f32 %v1196, %v1196
    %v1203 = vmul.f32 %v1192, %v1192
    %v1204 = vmul.f32 %v1197, %v1197
    %v1205 = vmul.f32 %v1191, %v1192
    %v1206 = vmul.f32 %v1196, %v1197
    %v1207 = vsub.f32 %v1193, %v1201
    %v1208 = vsub.f32 %v1198, %v1202
    %v1209 = vsub.f32 %v1194, %v1203
    %v1210 = vsub.f32 %v1199, %v1204
    %v1211 = vsub.f32 %v1195, %v1205
    %v1212 = vsub.f32 %v1200, %v1206
    %v1213 = vmul.f32 %v1205, 2.0
    %v1214 = vmul.f32 %v1206, 2.0
    %v1215 = vadd.f32 %v1213, 0.0001
    %v1216 = vadd.f32 %v1214, 0.0001
    %v1217 = vmul.f32 %v1211, 2.0
    %v1218 = vmul.f32 %v1212, 2.0
    %v1219 = vadd.f32 %v1217, 0.0009
    %v1220 = vadd.f32 %v1218, 0.0009
    %v1221 = vmul.f32 %v1215, %v1219
    %v1222 = vmul.f32 %v1216, %v1220
    %v1223 = vadd.f32 %v1201, %v1203
    %v1224 = vadd.f32 %v1202, %v1204
    %v1225 = vadd.f32 %v1223, 0.0001
    %v1226 = vadd.f32 %v1224, 0.0001
    %v1227 = vadd.f32 %v1207, %v1209
    %v1228 = vadd.f32 %v1208, %v1210
    %v1229 = vadd.f32 %v1227, 0.0009
    %v1230 = vadd.f32 %v1228, 0.0009
    %v1231 = vmul.f32 %v1225, %v1229
    %v1232 = vmul.f32 %v1226, %v1230
    %v1233 = vrcp.pop %v1231
    %v1234 = vmul.f32 %v1221, %v1233
    %v1235 = vrcp.pop %v1232
    %v1236 = vmul.f32 %v1222, %v1235
    %v1237 = vadd.f32 %v1234, %v1236
    %1238 = vadd.xlane.f32.xlu0 %v1237
    %v1239 = vpop.xlane.xlu0 %1238
    %v1240 = vrot.slane %v1239, 4
    %v1241 = vadd.f32 %v1239, %v1240
    %v1242 = vrot.slane %v1241, 2
    %v1243 = vadd.f32 %v1241, %v1242
    %v1244 = vrot.slane %v1243, 1
    %v1245 = vadd.f32 %v1243, %v1244
    %s1246 = vtos %v1245
    %v1247 = vstv %s1246
    %v1248 = vadd.f32 %v1247, 0.0
    %1249 = vst [vmem:[#allocation10] sm:$0xff] %v1248
    // Predicated region
    $region34: #{tpu_custom_call.1} parent=1 // pred_check
      _
    $region35: #{tpu_custom_call.1} parent=1 // pred_check_branch
      %1251 = sbr.rel (0) target = $region37
    $region36: #{tpu_custom_call.1} parent=1 // pred_region
      %s1253 = ssub.s32 128, 128
      %1254 = vsyncadd [#allocation4], %s1253
      %s1256 = sshll.u32 [#allocation10], 4
      %s1257 = int_to_ptr.vmem [resolvable:$true] %s1256
      %1259 = dma.vmem_to_hbm [thread:$0]  %s1257, 128, %s4, [#allocation4]
    $region37: #{tpu_custom_call.1} parent=1 // pred_fallthru
      _
    // Predicated region
    $region38: #{tpu_custom_call.1} parent=1 // pred_check
      _
    $region39: #{tpu_custom_call.1} parent=1 // pred_check_branch
      %1261 = sbr.rel (0) target = $region41
    $region40: #{tpu_custom_call.1} parent=1 // pred_region
      %1262 = dma.done [#allocation4], 128
    $region41: #{tpu_custom_call.1} parent=1 // pred_fallthru
      _
    %1263 = vsyncpa [#allocation3], 1
    %1264 = vsyncpa [#allocation6], 1
    %1265 = vsyncpa [#allocation9], 1
    %1266 = vsyncpa [#allocation4], 1

</llo_original>
